<compile_context>
chip_gen: v5e
topology: v5e:2x2
jax: 0.10.0
libtpu: 0.0.40
codegen_flags: <defaults>
</compile_context>

<pallas_src>
import functools

import jax
import jax.numpy as jnp
import numpy as np
from jax.experimental import pallas as pl
from jax.experimental.pallas import tpu as pltpu


def _reg_loss_kernel(occ_ref, ind_ref, mask_ref, feat_ref, tgt_ref,
                     loss_ref, pred_acc_ref, *, hw_total, hw_rem):
    # occ_ref:      SMEM (B, n_hw) int32  -- #masked-in indices per (batch, hw-tile)
    # ind_ref:      VMEM (1, 1, Kp) int32 -- gather indices (padded slots -> 0)
    # mask_ref:     VMEM (1, 1, Kp) f32   -- object mask (padded slots -> 0)
    # feat_ref:     VMEM (1, C, thw)      -- feature tile for batch b, hw-tile h
    # tgt_ref:      VMEM (1, C, Kp) f32   -- regression targets, channels-major
    # loss_ref:     VMEM (1, 1, Kp) f32   -- per-(batch, k) smooth-L1 partial sums
    # pred_acc_ref: VMEM (C, Kp) f32      -- gathered-prediction accumulator
    b = pl.program_id(0)
    h = pl.program_id(1)
    nh = pl.num_programs(1)
    thw = feat_ref.shape[2]

    @pl.when(h == 0)
    def _init():
        pred_acc_ref[...] = jnp.zeros_like(pred_acc_ref)

    # Skip the one-hot build + MXU work for hw-tiles with no masked-in index.
    @pl.when(occ_ref[b, h] > 0)
    def _gather():
        feat = feat_ref[0]                                    # (C, thw)
        if hw_rem:
            # Last block is a padded read past H*W: zero the invalid columns so
            # garbage (possibly NaN) never reaches the MXU.
            col = jax.lax.broadcasted_iota(jnp.int32, (1, thw), 1) + h * thw
            feat = jnp.where(col < hw_total, feat, jnp.zeros((), feat.dtype))

        # Tile-local indices: shift the (1, Kp) row, not the (thw, Kp) iota.
        ind_local = ind_ref[0] - h * thw                      # (1, Kp) int32
        Kp = ind_local.shape[1]
        hw_iota = jax.lax.broadcasted_iota(jnp.int32, (thw, Kp), 0)
        onehot = (hw_iota == ind_local).astype(jnp.bfloat16)  # 0/1 exact in bf16

        if feat.dtype == jnp.float32:
            # Exact 3-way bf16 split of the f32 feat tile: three single-pass
            # DEFAULT-precision MXU dots (vs 6 passes for Precision.HIGHEST),
            # bit-accurate selection since the one-hot is exact in bf16.
            hi = feat.astype(jnp.bfloat16)
            r1 = feat - hi.astype(jnp.float32)
            mid = r1.astype(jnp.bfloat16)
            lo = (r1 - mid.astype(jnp.float32)).astype(jnp.bfloat16)
            acc = (jnp.dot(hi, onehot, preferred_element_type=jnp.float32)
                   + jnp.dot(mid, onehot, preferred_element_type=jnp.float32)
                   + jnp.dot(lo, onehot, preferred_element_type=jnp.float32))
        else:
            acc = jnp.dot(feat.astype(jnp.bfloat16), onehot,
                          preferred_element_type=jnp.float32)
        pred_acc_ref[...] += acc

    @pl.when(h == nh - 1)
    def _finalize():
        mask_row = mask_ref[0]                                # (1, Kp) f32
        pred = pred_acc_ref[...]                              # (C, Kp) f32
        tgt = tgt_ref[0]                                      # (C, Kp) f32
        diff = (pred - tgt) * mask_row                        # == pred*m - gt*m
        absd = jnp.abs(diff)
        sl1 = jnp.where(absd < 1.0, 0.5 * diff * diff, absd - 0.5)
        # Sublane (C) reduce -> lane-dense (1, Kp) partial, written once per b.
        loss_ref[0] = jnp.sum(sl1, axis=0, keepdims=True)


def _pick_hw_tile(hw, c, kp, feat_itemsize, budget_bytes=6 << 20):
    """Largest hw tile whose per-step VMEM footprint fits the budget.

    Budgets the one-hot build temporaries (int32 iota + bool compare + bf16
    one-hot ~ kp*7, rounded to 8 B/element), the double-buffered feat tile and
    the three bf16 decomposition chunks.  Prefers tiles that divide hw so the
    padded-tail masking path is not needed.
    """
    per_hw = kp * 8 + c * (2 * feat_itemsize + 6)
    cap = budget_bytes // max(1, per_hw)
    cap = max(128, min(8192, cap))
    cap = (cap // 128) * 128
    if hw <= cap:
        return hw
    t = cap
    while t >= 128:
        if hw % t == 0:
            return t
        t -= 128
    return cap   # no 128-multiple divisor fits: cdiv grid + in-kernel masking


def reg_loss(output, mask, ind, target, *, hw_tile=None):
    """output: (B, C, H, W), mask: (B, K), ind: (B, K) int, target: (B, K, C)."""
    B, C, H, W = output.shape
    K = ind.shape[1]
    HW = H * W

    # Free reshape (no transpose, no dtype cast): HW stays on the lane axis.
    feat = output.reshape(B, C, HW)

    # Pad K (max_objects) up to the 128-lane width; padded slots carry mask=0.
    Kp = ((K + 127) // 128) * 128
    pad_k = Kp - K

    if hw_tile is None:
        hw_tile = _pick_hw_tile(HW, C, Kp, feat.dtype.itemsize)
    hw_tile = min(hw_tile, HW)
    n_hw = pl.cdiv(HW, hw_tile)
    hw_rem = HW % hw_tile

    # TODO(synk): PyTorch gather would error on ind >= H*W; we clamp instead
    # (acceptable iff upstream guarantees in-range indices for mask==1).
    ind_i32 = jnp.clip(ind.astype(jnp.int32), 0, HW - 1)
    ind_p = jnp.pad(ind_i32, ((0, 0), (0, pad_k)))[:, None, :]             # (B,1,Kp)
    mask_f = mask.astype(jnp.float32)
    mask_p = jnp.pad(mask_f, ((0, 0), (0, pad_k)))[:, None, :]             # (B,1,Kp)
    # Targets are tiny: channels-major so K sits on the lane axis.
    tgt_p = jnp.pad(jnp.transpose(target.astype(jnp.float32), (0, 2, 1)),
                    ((0, 0), (0, 0), (0, pad_k)))                          # (B,C,Kp)

    # Occupancy map: #masked-in indices per (batch, hw-tile).  Unoccupied tiles
    # skip the one-hot/matmul inside the kernel (pred stays 0, masked to 0).
    tile_id = ind_i32 // hw_tile                                           # (B, K)
    occ = jnp.sum((tile_id[:, None, :] == jnp.arange(n_hw)[None, :, None])
                  & (mask_f[:, None, :] > 0), axis=2).astype(jnp.int32)    # (B, n_hw)

    kernel = functools.partial(_reg_loss_kernel, hw_total=HW, hw_rem=hw_rem)

    grid_spec = pltpu.PrefetchScalarGridSpec(
        num_scalar_prefetch=1,
        grid=(B, n_hw),
        in_specs=[
            pl.BlockSpec((1, 1, Kp), lambda b, h, occ: (b, 0, 0)),         # ind
            pl.BlockSpec((1, 1, Kp), lambda b, h, occ: (b, 0, 0)),         # mask
            pl.BlockSpec((1, C, hw_tile), lambda b, h, occ: (b, 0, h)),    # feat
            pl.BlockSpec((1, C, Kp), lambda b, h, occ: (b, 0, 0)),         # target
        ],
        out_specs=pl.BlockSpec((1, 1, Kp), lambda b, h, occ: (b, 0, 0)),
        scratch_shapes=[pltpu.VMEM((C, Kp), jnp.float32)],
    )

    loss_parts = pl.pallas_call(
        kernel,
        grid_spec=grid_spec,
        out_shape=jax.ShapeDtypeStruct((B, 1, Kp), jnp.float32),
        compiler_params=pltpu.CompilerParams(
            # Batch axis parallel (megacore-shardable); HW reduction last.
            dimension_semantics=("parallel", "arbitrary")),
    )(occ, ind_p, mask_p, feat, tgt_p)

    # Tiny final reduction + normalization (glue, not compute).
    num = jnp.sum(mask_f)
    return jnp.sum(loss_parts) / (num + 0.0001)


def reg_loss_ref(output, mask, ind, target):
    """Pure-JAX reference mirroring the PyTorch forward."""
    B, C, H, W = output.shape
    feat = jnp.transpose(output, (0, 2, 3, 1)).reshape(B, H * W, C)
    pred = jnp.take_along_axis(feat, ind[:, :, None].astype(jnp.int32), axis=1)
    num = jnp.sum(mask.astype(jnp.float32))
    m3 = mask.astype(jnp.float32)[:, :, None]
    diff = pred * m3 - target * m3
    absd = jnp.abs(diff)
    sl1 = jnp.where(absd < 1.0, 0.5 * diff * diff, absd - 0.5)
    return jnp.sum(sl1) / (num + 0.0001)


if __name__ == "__main__":
    # Case 1: HW divisible by the tile -> multi-tile accumulation + occupancy
    # skip (hw_tile=128 gives 2 hw-tiles for HW=256).
    B, C, H, W, K = 2, 4, 16, 16, 8
    key = jax.random.PRNGKey(0)
    k1, k2, k3, k4 = jax.random.split(key, 4)

    output = jax.random.normal(k1, (B, C, H, W), dtype=jnp.float32)
    target = jax.random.normal(k2, (B, K, C), dtype=jnp.float32)
    ind = jax.random.randint(k3, (B, K), 0, H * W, dtype=jnp.int32)
    mask = (jax.random.uniform(k4, (B, K)) > 0.3).astype(jnp.float32)

    loss = jax.block_until_ready(reg_loss(output, mask, ind, target, hw_tile=128))
    loss_ref_v = jax.block_until_ready(reg_loss_ref(output, mask, ind, target))
    assert np.allclose(np.asarray(loss), np.asarray(loss_ref_v),
                       rtol=1e-5, atol=1e-5), (loss, loss_ref_v)

    # Case 2: HW (=384) not divisible by the tile (=256) -> cdiv grid plus
    # in-kernel masking of the padded tail columns.
    B2, C2, H2, W2, K2 = 2, 4, 16, 24, 8
    j1, j2, j3, j4 = jax.random.split(jax.random.PRNGKey(1), 4)
    output2 = jax.random.normal(j1, (B2, C2, H2, W2), dtype=jnp.float32)
    target2 = jax.random.normal(j2, (B2, K2, C2), dtype=jnp.float32)
    ind2 = jax.random.randint(j3, (B2, K2), 0, H2 * W2, dtype=jnp.int32)
    mask2 = (jax.random.uniform(j4, (B2, K2)) > 0.3).astype(jnp.float32)

    loss2 = jax.block_until_ready(
        reg_loss(output2, mask2, ind2, target2, hw_tile=256))
    loss2_ref = jax.block_until_ready(reg_loss_ref(output2, mask2, ind2, target2))
    assert np.allclose(np.asarray(loss2), np.asarray(loss2_ref),
                       rtol=1e-5, atol=1e-5), (loss2, loss2_ref)

    print("KERNEL_OK")
</pallas_src>

<mosaic_0001>
module attributes {stable_mosaic.version = 11 : i64} {
  func.func @_reg_loss_kernel(%arg0: i32, %arg1: i32, %arg2: memref<2x2xi32, #tpu.memory_space<smem>>, %arg3: memref<1x1x128xi32, #tpu.memory_space<vmem>>, %arg4: memref<1x1x128xf32, #tpu.memory_space<vmem>>, %arg5: memref<1x4x128xf32, #tpu.memory_space<vmem>>, %arg6: memref<1x4x128xf32, #tpu.memory_space<vmem>>, %arg7: memref<1x1x128xf32, #tpu.memory_space<vmem>>, %arg8: memref<4x128xf32, #tpu.memory_space<vmem>>) attributes {dimension_semantics = [#tpu.dimension_semantics<parallel>, #tpu.dimension_semantics<arbitrary>], iteration_bounds = array<i64: 2, 2>, scalar_prefetch = 1 : i64, scratch_operands = 1 : i64, tpu.core_type = #tpu.core_type<tc>, window_params = [{transform_indices = @transform_0, window_bounds = array<i64: 1, 1, 128>}, {transform_indices = @transform_1, window_bounds = array<i64: 1, 1, 128>}, {transform_indices = @transform_2, window_bounds = array<i64: 1, 4, 128>}, {transform_indices = @transform_3, window_bounds = array<i64: 1, 4, 128>}, {transform_indices = @transform_4, window_bounds = array<i64: 1, 1, 128>}]} {
    %c0_i32 = arith.constant 0 : i32
    %0 = arith.cmpi eq, %arg1, %c0_i32 : i32
    %1 = arith.extui %0 : i1 to i32
    %c0_i32_0 = arith.constant 0 : i32
    %2 = arith.cmpi ne, %1, %c0_i32_0 : i32
    scf.if %2 {
      %cst = arith.constant 0.000000e+00 : f32
      %12 = vector.broadcast %cst : f32 to vector<4x128xf32>
      %c0 = arith.constant 0 : index
      %c0_4 = arith.constant 0 : index
      %13 = vector.load %arg8[%c0, %c0_4] : memref<4x128xf32, #tpu.memory_space<vmem>>, vector<4x128xf32>
      tpu.vector_store %arg8[%c0, %c0_4], %12 {strides = array<i32>} : memref<4x128xf32, #tpu.memory_space<vmem>>, vector<4x128xf32>,
    } else {
    }
    %3 = arith.index_cast %arg0 : i32 to index
    %4 = arith.index_cast %arg1 : i32 to index
    %5 = memref.load %arg2[%3, %4] : memref<2x2xi32, #tpu.memory_space<smem>>
    %c0_i32_1 = arith.constant 0 : i32
    %6 = arith.cmpi sgt, %5, %c0_i32_1 : i32
    %7 = arith.extui %6 : i1 to i32
    %c0_i32_2 = arith.constant 0 : i32
    %8 = arith.cmpi ne, %7, %c0_i32_2 : i32
    scf.if %8 {
      %c0 = arith.constant 0 : index
      %c0_4 = arith.constant 0 : index
      %c0_5 = arith.constant 0 : index
      %12 = vector.load %arg5[%c0, %c0_4, %c0_5] : memref<1x4x128xf32, #tpu.memory_space<vmem>>, vector<1x4x128xf32>
      %13 = vector.shape_cast %12 : vector<1x4x128xf32> to vector<4x128xf32>
      %c0_6 = arith.constant 0 : index
      %c0_7 = arith.constant 0 : index
      %c0_8 = arith.constant 0 : index
      %14 = vector.load %arg3[%c0_6, %c0_7, %c0_8] : memref<1x1x128xi32, #tpu.memory_space<vmem>>, vector<1x1x128xi32>
      %15 = vector.shape_cast %14 : vector<1x1x128xi32> to vector<1x128xi32>
      %c128_i32 = arith.constant 128 : i32
      %16 = arith.muli %arg1, %c128_i32 : i32
      %17 = vector.broadcast %16 : i32 to vector<1x128xi32>
      %18 = arith.subi %15, %17 : vector<1x128xi32>
      %19 = tpu.iota {dimensions = array<i32: 0>} : vector<128x128xi32>
      %20 = vector.broadcast %18 : vector<1x128xi32> to vector<128x128xi32>
      %21 = arith.cmpi eq, %19, %20 : vector<128x128xi32>
      %22 = arith.extui %21 : vector<128x128xi1> to vector<128x128xi32>
      %23 = arith.sitofp %22 : vector<128x128xi32> to vector<128x128xf32>
      %24 = arith.truncf %23 : vector<128x128xf32> to vector<128x128xbf16>
      %25 = arith.truncf %13 : vector<4x128xf32> to vector<4x128xbf16>
      %26 = arith.extf %25 : vector<4x128xbf16> to vector<4x128xf32>
      %27 = arith.subf %13, %26 : vector<4x128xf32>
      %28 = arith.truncf %27 : vector<4x128xf32> to vector<4x128xbf16>
      %29 = arith.extf %28 : vector<4x128xbf16> to vector<4x128xf32>
      %30 = arith.subf %27, %29 : vector<4x128xf32>
      %31 = arith.truncf %30 : vector<4x128xf32> to vector<4x128xbf16>
      %cst = arith.constant dense<0.000000e+00> : vector<4x128xf32>
      %32 = tpu.matmul %25, %24, %cst {dimension_numbers = #tpu.dot_dimension_numbers<[1], [0], [0], [1], [0, 0, 1, 1], [], []>} : vector<4x128xbf16>, vector<128x128xbf16>, vector<4x128xf32> -> vector<4x128xf32>
      %cst_9 = arith.constant dense<0.000000e+00> : vector<4x128xf32>
      %33 = tpu.matmul %28, %24, %cst_9 {dimension_numbers = #tpu.dot_dimension_numbers<[1], [0], [0], [1], [0, 0, 1, 1], [], []>} : vector<4x128xbf16>, vector<128x128xbf16>, vector<4x128xf32> -> vector<4x128xf32>
      %34 = arith.addf %32, %33 : vector<4x128xf32>
      %cst_10 = arith.constant dense<0.000000e+00> : vector<4x128xf32>
      %35 = tpu.matmul %31, %24, %cst_10 {dimension_numbers = #tpu.dot_dimension_numbers<[1], [0], [0], [1], [0, 0, 1, 1], [], []>} : vector<4x128xbf16>, vector<128x128xbf16>, vector<4x128xf32> -> vector<4x128xf32>
      %36 = arith.addf %34, %35 : vector<4x128xf32>
      %c0_11 = arith.constant 0 : index
      %c0_12 = arith.constant 0 : index
      %37 = vector.load %arg8[%c0_11, %c0_12] : memref<4x128xf32, #tpu.memory_space<vmem>>, vector<4x128xf32>
      %38 = arith.addf %37, %36 : vector<4x128xf32>
      %c0_13 = arith.constant 0 : index
      %c0_14 = arith.constant 0 : index
      %39 = vector.load %arg8[%c0_13, %c0_14] : memref<4x128xf32, #tpu.memory_space<vmem>>, vector<4x128xf32>
      tpu.vector_store %arg8[%c0_13, %c0_14], %38 {strides = array<i32>} : memref<4x128xf32, #tpu.memory_space<vmem>>, vector<4x128xf32>,
    } else {
    }
    %c1_i32 = arith.constant 1 : i32
    %9 = arith.cmpi eq, %arg1, %c1_i32 : i32
    %10 = arith.extui %9 : i1 to i32
    %c0_i32_3 = arith.constant 0 : i32
    %11 = arith.cmpi ne, %10, %c0_i32_3 : i32
    scf.if %11 {
      %c0 = arith.constant 0 : index
      %c0_4 = arith.constant 0 : index
      %c0_5 = arith.constant 0 : index
      %12 = vector.load %arg4[%c0, %c0_4, %c0_5] : memref<1x1x128xf32, #tpu.memory_space<vmem>>, vector<1x1x128xf32>
      %13 = vector.shape_cast %12 : vector<1x1x128xf32> to vector<1x128xf32>
      %c0_6 = arith.constant 0 : index
      %c0_7 = arith.constant 0 : index
      %14 = vector.load %arg8[%c0_6, %c0_7] : memref<4x128xf32, #tpu.memory_space<vmem>>, vector<4x128xf32>
      %c0_8 = arith.constant 0 : index
      %c0_9 = arith.constant 0 : index
      %c0_10 = arith.constant 0 : index
      %15 = vector.load %arg6[%c0_8, %c0_9, %c0_10] : memref<1x4x128xf32, #tpu.memory_space<vmem>>, vector<1x4x128xf32>
      %16 = vector.shape_cast %15 : vector<1x4x128xf32> to vector<4x128xf32>
      %17 = arith.subf %14, %16 : vector<4x128xf32>
      %18 = vector.broadcast %13 : vector<1x128xf32> to vector<4x128xf32>
      %19 = arith.mulf %17, %18 : vector<4x128xf32>
      %20 = math.absf %19 : vector<4x128xf32>
      %cst = arith.constant 1.000000e+00 : f32
      %21 = vector.broadcast %cst : f32 to vector<4x128xf32>
      %22 = arith.cmpf olt, %20, %21 : vector<4x128xf32>
      %cst_11 = arith.constant 5.000000e-01 : f32
      %23 = vector.broadcast %cst_11 : f32 to vector<4x128xf32>
      %24 = arith.mulf %23, %19 : vector<4x128xf32>
      %25 = arith.mulf %24, %19 : vector<4x128xf32>
      %cst_12 = arith.constant 5.000000e-01 : f32
      %26 = vector.broadcast %cst_12 : f32 to vector<4x128xf32>
      %27 = arith.subf %20, %26 : vector<4x128xf32>
      %28 = arith.select %22, %25, %27 : vector<4x128xi1>, vector<4x128xf32>
      %cst_13 = arith.constant dense<0.000000e+00> : vector<128xf32>
      %29 = vector.multi_reduction <add>, %28, %cst_13 [0] : vector<4x128xf32> to vector<128xf32>
      %30 = vector.shape_cast %29 : vector<128xf32> to vector<1x128xf32>
      %c0_14 = arith.constant 0 : index
      %c0_15 = arith.constant 0 : index
      %c0_16 = arith.constant 0 : index
      %31 = vector.load %arg7[%c0_14, %c0_15, %c0_16] : memref<1x1x128xf32, #tpu.memory_space<vmem>>, vector<1x1x128xf32>
      %32 = vector.shape_cast %31 : vector<1x1x128xf32> to vector<1x128xf32>
      %33 = vector.shape_cast %30 : vector<1x128xf32> to vector<1x1x128xf32>
      tpu.vector_store %arg7[%c0_14, %c0_15, %c0_16], %33 {strides = array<i32>} : memref<1x1x128xf32, #tpu.memory_space<vmem>>, vector<1x1x128xf32>,
    } else {
    }
    return
  }
  func.func @transform_0(%arg0: i32, %arg1: i32, %arg2: memref<2x2xi32, #tpu.memory_space<smem>>) -> (i32, i32, i32) {
    %c0_i32 = arith.constant 0 : i32
    %c0_i32_0 = arith.constant 0 : i32
    %c0_i32_1 = arith.constant 0 : i32
    return %arg0, %c0_i32, %c0_i32_0 : i32, i32, i32
  }
  func.func @transform_1(%arg0: i32, %arg1: i32, %arg2: memref<2x2xi32, #tpu.memory_space<smem>>) -> (i32, i32, i32) {
    %c0_i32 = arith.constant 0 : i32
    %c0_i32_0 = arith.constant 0 : i32
    %c0_i32_1 = arith.constant 0 : i32
    return %arg0, %c0_i32, %c0_i32_0 : i32, i32, i32
  }
  func.func @transform_2(%arg0: i32, %arg1: i32, %arg2: memref<2x2xi32, #tpu.memory_space<smem>>) -> (i32, i32, i32) {
    %c0_i32 = arith.constant 0 : i32
    %c0_i32_0 = arith.constant 0 : i32
    return %arg0, %c0_i32, %arg1 : i32, i32, i32
  }
  func.func @transform_3(%arg0: i32, %arg1: i32, %arg2: memref<2x2xi32, #tpu.memory_space<smem>>) -> (i32, i32, i32) {
    %c0_i32 = arith.constant 0 : i32
    %c0_i32_0 = arith.constant 0 : i32
    %c0_i32_1 = arith.constant 0 : i32
    return %arg0, %c0_i32, %c0_i32_0 : i32, i32, i32
  }
  func.func @transform_4(%arg0: i32, %arg1: i32, %arg2: memref<2x2xi32, #tpu.memory_space<smem>>) -> (i32, i32, i32) {
    %c0_i32 = arith.constant 0 : i32
    %c0_i32_0 = arith.constant 0 : i32
    %c0_i32_1 = arith.constant 0 : i32
    return %arg0, %c0_i32, %c0_i32_0 : i32, i32, i32
  }
}

</mosaic_0001>

<llo_original>
// kernel: tpu_custom_call.1
$region0: #{tpu_custom_call.1}
  #allocation0 [shape = 'u32[]', space=smem, size = 0x4, offset = 0x4, fixed_abs, tag = 'smem constant byte address 0x4 - core index']
  #allocation1 [shape = 'u32[72,128]{1,0:T(1,128)}', space=vmem, size = 0x9000, scoped, tag = 'internal scratch']
  #allocation2 [shape = 'f32[4,128]{1,0:T(4,128)}', space=vmem, size = 0x800, scoped, tag = 'scratch operand']
  #allocation3 [shape = 's32[1]{0}', space=sflag, size = 0x4, scoped, tag = 'scoped memory for tpu_custom_call.1']
  #allocation4 [shape = 'u8[1024]{0}', space=smem, size = 0x400, scoped, tag = 'prefetched SMEM operand 0']
  %s0 = inlined_call_operand.hbm [shape: s32[2,2], index: 0, kind: input, shape index: {}]
  %s1 = inlined_call_operand.hbm [shape: s32[2,1,128], index: 1, kind: input, shape index: {}]
  %s2 = inlined_call_operand.hbm [shape: f32[2,1,128], index: 2, kind: input, shape index: {}]
  %s3 = inlined_call_operand.hbm [shape: f32[2,4,256], index: 3, kind: input, shape index: {}]
  %s4 = inlined_call_operand.hbm [shape: f32[2,4,128], index: 4, kind: input, shape index: {}]
  %s5 = inlined_call_operand.hbm [shape: f32[2,1,128], index: 5, kind: output, shape index: {}]
  %s6 = sld [smem:[#allocation0]]
  $region77: #{tpu_custom_call.1} parent=0
    _
  %s8 = ssub.s32 1, %s6
  %s9 = scalar_select 0, %s8, %s6
  %s11 = sshll.u32 %s0, 4
  %s12 = int_to_ptr.hbm [resolvable:$true] %s11
  %14 = dma.hbm_to_smem %s12, 32, [#allocation4], [#allocation3]
  %16 = dma.done [#allocation3], 32
  %17 = sfence
  $region1: #{tpu_custom_call.1} parent=0
    #allocation5 [shape = 'u8[1024]{0}', space=vmem, size = 0x400, scoped, tag = 'input window, operand 1']
    #allocation6 [shape = 's32[2]{0}', space=sflag, size = 0x8, scoped, tag = 'scoped memory for tpu_custom_call.1']
    #allocation7 [shape = 's32[2]{0}', space=sflag, size = 0x8, scoped, tag = 'scoped memory for tpu_custom_call.1']
    #allocation8 [shape = 'u8[1024]{0}', space=vmem, size = 0x400, scoped, tag = 'input window, operand 2']
    #allocation9 [shape = 's32[2]{0}', space=sflag, size = 0x8, scoped, tag = 'scoped memory for tpu_custom_call.1']
    #allocation10 [shape = 'u8[4096]{0}', space=vmem, size = 0x1000, scoped, tag = 'input window, operand 3']
    #allocation11 [shape = 'u8[4096]{0}', space=vmem, size = 0x1000, scoped, tag = 'input window, operand 4']
    #allocation12 [shape = 's32[2]{0}', space=sflag, size = 0x8, scoped, tag = 'scoped memory for tpu_custom_call.1']
    #allocation13 [shape = 'u8[1024]{0}', space=vmem, size = 0x400, scoped, tag = 'output window, operand 0']
    %18 = vsyncpa [#allocation6], 0
    %s19 = scalar_lea.sflag [#allocation6], 1
    %20 = vsyncpa %s19, 0
    %21 = vsyncpa [#allocation9], 0
    %s22 = scalar_lea.sflag [#allocation9], 1
    %23 = vsyncpa %s22, 0
    %24 = vsyncpa [#allocation12], 0
    %s25 = scalar_lea.sflag [#allocation12], 1
    %26 = vsyncpa %s25, 0
    %27 = vsyncpa [#allocation7], 0
    %s28 = scalar_lea.sflag [#allocation7], 1
    %29 = vsyncpa %s28, 0
    loop: start=0, step=1, limit=6
    $region2: #{tpu_custom_call.1} parent=1 // loop_pre_header
      _
    $region3: #{tpu_custom_call.1} parent=1 // loop_header
      %s31 = sphi 0, %s35
      %p32 = scmp.ge.s32.totalorder %s31, 6
      %s38 = sphi 0, %s50
      %s39 = sphi 0, %s46
      %s40 = sphi 0, %s38
      %s41 = sphi 0, %s39
      %s42 = sphi 0, %s40
      %s43 = sphi 0, %s41
      %s53 = sphi 0, %s55
      %s56 = sphi 0, %s53
      %s57 = sphi 0, %s56
      %s73 = sphi 0, %s57
      %s79 = sphi 0, %s81
      %s82 = sphi 0, %s79
      %s83 = sphi 0, %s82
      %s99 = sphi 0, %s83
      %s107 = sphi 0, %s109
      %s110 = sphi 0, %s107
      %s111 = sphi 0, %s110
      %s127 = sphi 0, %s111
      %s133 = sphi 0, %s135
      %s136 = sphi 0, %s133
      %s137 = sphi 0, %s136
      %s153 = sphi 0, %s137
      %s159 = sphi 0, %s161
      %s162 = sphi 0, %s159
      %s163 = sphi 0, %s162
      %s179 = sphi 0, %s163
    $region4: #{tpu_custom_call.1} parent=1 // loop_header_branch
      %34 = sbr.rel (%p32) target = $region8
    $region5: #{tpu_custom_call.1} parent=1 // loop_body
      %s36 = ssub.s32 %s31, 1
      %s37 = ssub.s32 %s31, 2
      %s44 = sadd.s32 1, %s39
      %p45 = scmp.ge.s32.totalorder %s44, 2
      %s46 = scalar_select %p45, 0, %s44
      %s47 = sadd.s32 1, %s38
      %s48 = scalar_select %p45, %s47, %s38
      %p49 = scmp.ge.s32.totalorder %s48, 2
      %s50 = scalar_select %p49, 0, %s48
      %s51 = ssub.s32 %s38, %s50
      %p52 = scmp.eq.s32.totalorder %s51, 0
      %s54 = sadd.s32 %s53, 1
      %s55 = scalar_select %p52, %s53, %s54
      %p58 = pneg %p52
      %p59 = scmp.eq.s32.totalorder %s31, 3
      %p60 = por %p58, %p59
      %p61 = scmp.ne.s32.totalorder %s53, %s56
      %p62 = scmp.eq.s32.totalorder %s31, 0
      %p63 = por %p61, %p62
      %p64 = scmp.ne.s32.totalorder %s53, %s56
      %p65 = scmp.eq.s32.totalorder %s36, 3
      %p66 = por %p64, %p65
      %p67 = scmp.ne.s32.totalorder %s56, %s57
      %p68 = scmp.eq.s32.totalorder %s36, 0
      %p69 = por %p67, %p68
      %p70 = scmp.ne.s32.totalorder %s56, %s57
      %p71 = scmp.eq.s32.totalorder %s37, 3
      %p72 = por %p70, %p71
      %p74 = scmp.ne.s32.totalorder %s57, %s73
      %p75 = scmp.eq.s32.totalorder %s37, 0
      %p76 = por %p74, %p75
      %s77 = ssub.s32 %s38, %s50
      %p78 = scmp.eq.s32.totalorder %s77, 0
      %s80 = sadd.s32 %s79, 1
      %s81 = scalar_select %p78, %s79, %s80
      %p84 = pneg %p78
      %p85 = scmp.eq.s32.totalorder %s31, 3
      %p86 = por %p84, %p85
      %p87 = scmp.ne.s32.totalorder %s79, %s82
      %p88 = scmp.eq.s32.totalorder %s31, 0
      %p89 = por %p87, %p88
      %p90 = scmp.ne.s32.totalorder %s79, %s82
      %p91 = scmp.eq.s32.totalorder %s36, 3
      %p92 = por %p90, %p91
      %p93 = scmp.ne.s32.totalorder %s82, %s83
      %p94 = scmp.eq.s32.totalorder %s36, 0
      %p95 = por %p93, %p94
      %p96 = scmp.ne.s32.totalorder %s82, %s83
      %p97 = scmp.eq.s32.totalorder %s37, 3
      %p98 = por %p96, %p97
      %p100 = scmp.ne.s32.totalorder %s83, %s99
      %p101 = scmp.eq.s32.totalorder %s37, 0
      %p102 = por %p100, %p101
      %s103 = ssub.s32 %s38, %s50
      %s104 = ssub.s32 %s39, %s46
      %s105 = sor.u32 %s103, %s104
      %p106 = scmp.eq.s32.totalorder %s105, 0
      %s108 = sadd.s32 %s107, 1
      %s109 = scalar_select %p106, %s107, %s108
      %p112 = pneg %p106
      %p113 = scmp.eq.s32.totalorder %s31, 3
      %p114 = por %p112, %p113
      %p115 = scmp.ne.s32.totalorder %s107, %s110
      %p116 = scmp.eq.s32.totalorder %s31, 0
      %p117 = por %p115, %p116
      %p118 = scmp.ne.s32.totalorder %s107, %s110
      %p119 = scmp.eq.s32.totalorder %s36, 3
      %p120 = por %p118, %p119
      %p121 = scmp.ne.s32.totalorder %s110, %s111
      %p122 = scmp.eq.s32.totalorder %s36, 0
      %p123 = por %p121, %p122
      %p124 = scmp.ne.s32.totalorder %s110, %s111
      %p125 = scmp.eq.s32.totalorder %s37, 3
      %p126 = por %p124, %p125
      %p128 = scmp.ne.s32.totalorder %s111, %s127
      %p129 = scmp.eq.s32.totalorder %s37, 0
      %p130 = por %p128, %p129
      %s131 = ssub.s32 %s38, %s50
      %p132 = scmp.eq.s32.totalorder %s131, 0
      %s134 = sadd.s32 %s133, 1
      %s135 = scalar_select %p132, %s133, %s134
      %p138 = pneg %p132
      %p139 = scmp.eq.s32.totalorder %s31, 3
      %p140 = por %p138, %p139
      %p141 = scmp.ne.s32.totalorder %s133, %s136
      %p142 = scmp.eq.s32.totalorder %s31, 0
      %p143 = por %p141, %p142
      %p144 = scmp.ne.s32.totalorder %s133, %s136
      %p145 = scmp.eq.s32.totalorder %s36, 3
      %p146 = por %p144, %p145
      %p147 = scmp.ne.s32.totalorder %s136, %s137
      %p148 = scmp.eq.s32.totalorder %s36, 0
      %p149 = por %p147, %p148
      %p150 = scmp.ne.s32.totalorder %s136, %s137
      %p151 = scmp.eq.s32.totalorder %s37, 3
      %p152 = por %p150, %p151
      %p154 = scmp.ne.s32.totalorder %s137, %s153
      %p155 = scmp.eq.s32.totalorder %s37, 0
      %p156 = por %p154, %p155
      %s157 = ssub.s32 %s38, %s50
      %p158 = scmp.eq.s32.totalorder %s157, 0
      %s160 = sadd.s32 %s159, 1
      %s161 = scalar_select %p158, %s159, %s160
      %p164 = pneg %p158
      %p165 = scmp.eq.s32.totalorder %s31, 3
      %p166 = por %p164, %p165
      %p167 = scmp.ne.s32.totalorder %s159, %s162
      %p168 = scmp.eq.s32.totalorder %s31, 0
      %p169 = por %p167, %p168
      %p170 = scmp.ne.s32.totalorder %s159, %s162
      %p171 = scmp.eq.s32.totalorder %s36, 3
      %p172 = por %p170, %p171
      %p173 = scmp.ne.s32.totalorder %s162, %s163
      %p174 = scmp.eq.s32.totalorder %s36, 0
      %p175 = por %p173, %p174
      %p176 = scmp.ne.s32.totalorder %s162, %s163
      %p177 = scmp.eq.s32.totalorder %s37, 3
      %p178 = por %p176, %p177
      %p180 = scmp.ne.s32.totalorder %s163, %s179
      %p181 = scmp.eq.s32.totalorder %s37, 0
      %p182 = por %p180, %p181
      %p183 = scmp.le.s32.totalorder 1, %s31
      %p184 = scmp.lt.s32.totalorder %s31, 5
      %p185 = pnand %p183, %p184
      %p186 = pneg %p185
      // Predicated region
      $region9: #{tpu_custom_call.1} parent=5 // pred_check
        _
      $region10: #{tpu_custom_call.1} parent=5 // pred_check_branch
        %188 = sbr.rel (%p185) target = $region12
      $region11: #{tpu_custom_call.1} parent=5 // pred_region
        %s189 = ssub.s32 %s31, 1
      $region12: #{tpu_custom_call.1} parent=5 // pred_fallthru
        _
      %p190 = scmp.lt.s32.totalorder %s31, 4
      // Predicated region
      $region13: #{tpu_custom_call.1} parent=5 // pred_check
        %p191 = pneg %p190
      $region14: #{tpu_custom_call.1} parent=5 // pred_check_branch
        %193 = sbr.rel (%p191) target = $region16
      $region15: #{tpu_custom_call.1} parent=5 // pred_region
        // Predicated region
        $region17: #{tpu_custom_call.1} parent=15 // pred_check
          %p194 = pneg %p63
        $region18: #{tpu_custom_call.1} parent=15 // pred_check_branch
          %196 = sbr.rel (%p194) target = $region20
        $region19: #{tpu_custom_call.1} parent=15 // pred_region
          %s197 = sand.u32 %s53, 1
          %s198 = scalar_lea.sflag [#allocation6], %s197
          %s199 = sand.u32 %s53, 1
          %s200 = scalar_lea.vmem [#allocation5], %s199
          %202 = vsyncadd %s198, 0
          %s203 = scalar_lea.hbm %s1, %s38
          %s205 = sshll.u32 %s203, 4
          %s206 = int_to_ptr.hbm [resolvable:$true] %s205
          %s207 = sshll.u32 %s200, 4
          %s208 = int_to_ptr.vmem [resolvable:$true] %s207
          %210 = dma.hbm_to_vmem [thread:$0]  %s206, 16, %s208, %s198
        $region20: #{tpu_custom_call.1} parent=15 // pred_fallthru
          _
        // Predicated region
        $region21: #{tpu_custom_call.1} parent=15 // pred_check
          %p211 = pneg %p89
        $region22: #{tpu_custom_call.1} parent=15 // pred_check_branch
          %213 = sbr.rel (%p211) target = $region24
        $region23: #{tpu_custom_call.1} parent=15 // pred_region
          %s214 = sand.u32 %s31, 1
          %s215 = scalar_lea.sflag [#allocation9], %s214
          %s216 = sand.u32 %s79, 1
          %s217 = scalar_lea.vmem [#allocation8], %s216
          %219 = vsyncadd %s215, 0
          %s220 = scalar_lea.hbm %s2, %s38
          %s222 = sshll.u32 %s220, 4
          %s223 = int_to_ptr.hbm [resolvable:$true] %s222
          %s224 = sshll.u32 %s217, 4
          %s225 = int_to_ptr.vmem [resolvable:$true] %s224
          %227 = dma.hbm_to_vmem [thread:$0]  %s223, 16, %s225, %s215
        $region24: #{tpu_custom_call.1} parent=15 // pred_fallthru
          _
        // Predicated region
        $region25: #{tpu_custom_call.1} parent=15 // pred_check
          %p228 = pneg %p117
        $region26: #{tpu_custom_call.1} parent=15 // pred_check_branch
          %230 = sbr.rel (%p228) target = $region28
        $region27: #{tpu_custom_call.1} parent=15 // pred_region
          %s231 = sand.u32 %s31, 1
          %s232 = scalar_lea.sflag [#allocation9], %s231
          %s233 = sand.u32 %s107, 1
          %s234 = smul.addr %s233, 4
          %s235 = scalar_lea.vmem [#allocation10], %s234
          %237 = vsyncadd %s232, 0
          %s238 = smul.addr %s38, 2
          %s239 = sadd.s32 %s39, %s238
          %s240 = smul.addr %s239, 4
          %s241 = scalar_lea.hbm %s3, %s240
          %s243 = sshll.u32 %s241, 4
          %s244 = int_to_ptr.hbm [resolvable:$true] %s243
          %s245 = sshll.u32 %s235, 4
          %s246 = int_to_ptr.vmem [resolvable:$true] %s245
          %248 = dma.hbm_to_vmem [thread:$0]  %s244, 64, %s246, %s232
        $region28: #{tpu_custom_call.1} parent=15 // pred_fallthru
          _
        // Predicated region
        $region29: #{tpu_custom_call.1} parent=15 // pred_check
          %p249 = pneg %p143
        $region30: #{tpu_custom_call.1} parent=15 // pred_check_branch
          %251 = sbr.rel (%p249) target = $region32
        $region31: #{tpu_custom_call.1} parent=15 // pred_region
          %s252 = sand.u32 %s133, 1
          %s253 = scalar_lea.sflag [#allocation12], %s252
          %s254 = sand.u32 %s133, 1
          %s255 = smul.addr %s254, 4
          %s256 = scalar_lea.vmem [#allocation11], %s255
          %258 = vsyncadd %s253, 0
          %s259 = smul.addr %s38, 4
          %s260 = scalar_lea.hbm %s4, %s259
          %s262 = sshll.u32 %s260, 4
          %s263 = int_to_ptr.hbm [resolvable:$true] %s262
          %s264 = sshll.u32 %s256, 4
          %s265 = int_to_ptr.vmem [resolvable:$true] %s264
          %267 = dma.hbm_to_vmem [thread:$0]  %s263, 64, %s265, %s253
        $region32: #{tpu_custom_call.1} parent=15 // pred_fallthru
          _
      $region16: #{tpu_custom_call.1} parent=5 // pred_fallthru
        _
      %p268 = scmp.le.s32.totalorder 1, %s31
      %p269 = scmp.lt.s32.totalorder %s31, 5
      %p270 = pnand %p268, %p269
      %p271 = pneg %p270
      // Predicated region
      $region33: #{tpu_custom_call.1} parent=5 // pred_check
        _
      $region34: #{tpu_custom_call.1} parent=5 // pred_check_branch
        %273 = sbr.rel (%p270) target = $region36
      $region35: #{tpu_custom_call.1} parent=5 // pred_region
        %s274 = ssub.s32 %s31, 1
        %s275 = sand.u32 %s56, 1
        %s276 = scalar_lea.sflag [#allocation6], %s275
        %s277 = sand.u32 %s56, 1
        %s278 = scalar_lea.vmem [#allocation5], %s277
        // Predicated region
        $region37: #{tpu_custom_call.1} parent=35 // pred_check
          %p279 = pneg %p69
        $region38: #{tpu_custom_call.1} parent=35 // pred_check_branch
          %281 = sbr.rel (%p279) target = $region40
        $region39: #{tpu_custom_call.1} parent=35 // pred_region
          %283 = dma.done %s276, 16
        $region40: #{tpu_custom_call.1} parent=35 // pred_fallthru
          _
        %s284 = sand.u32 %s36, 1
        %s285 = scalar_lea.sflag [#allocation9], %s284
        %s286 = sand.u32 %s82, 1
        %s287 = scalar_lea.vmem [#allocation8], %s286
        // Predicated region
        $region41: #{tpu_custom_call.1} parent=35 // pred_check
          %p288 = pneg %p95
        $region42: #{tpu_custom_call.1} parent=35 // pred_check_branch
          %290 = sbr.rel (%p288) target = $region44
        $region43: #{tpu_custom_call.1} parent=35 // pred_region
          %292 = dma.done %s285, 16
        $region44: #{tpu_custom_call.1} parent=35 // pred_fallthru
          _
        %s293 = sand.u32 %s36, 1
        %s294 = scalar_lea.sflag [#allocation9], %s293
        %s295 = sand.u32 %s110, 1
        %s296 = smul.addr %s295, 4
        %s297 = scalar_lea.vmem [#allocation10], %s296
        // Predicated region
        $region45: #{tpu_custom_call.1} parent=35 // pred_check
          %p298 = pneg %p123
        $region46: #{tpu_custom_call.1} parent=35 // pred_check_branch
          %300 = sbr.rel (%p298) target = $region48
        $region47: #{tpu_custom_call.1} parent=35 // pred_region
          %302 = dma.done %s294, 64
        $region48: #{tpu_custom_call.1} parent=35 // pred_fallthru
          _
        %s303 = sand.u32 %s136, 1
        %s304 = scalar_lea.sflag [#allocation12], %s303
        %s305 = sand.u32 %s136, 1
        %s306 = smul.addr %s305, 4
        %s307 = scalar_lea.vmem [#allocation11], %s306
        // Predicated region
        $region49: #{tpu_custom_call.1} parent=35 // pred_check
          %p308 = pneg %p149
        $region50: #{tpu_custom_call.1} parent=35 // pred_check_branch
          %310 = sbr.rel (%p308) target = $region52
        $region51: #{tpu_custom_call.1} parent=35 // pred_region
          %312 = dma.done %s304, 64
        $region52: #{tpu_custom_call.1} parent=35 // pred_fallthru
          _
        %s313 = sand.u32 %s56, 1
        %s314 = scalar_lea.sflag [#allocation6], %s313
        %s315 = sand.u32 %s56, 1
        %s316 = scalar_lea.vmem [#allocation5], %s315
        %p317 = pneg %p69
        %p318 = pneg %p66
        %s319 = sand.u32 %s36, 1
        %s320 = scalar_lea.sflag [#allocation9], %s319
        %s321 = sand.u32 %s82, 1
        %s322 = scalar_lea.vmem [#allocation8], %s321
        %p323 = pneg %p95
        %p324 = pneg %p92
        %s325 = sand.u32 %s36, 1
        %s326 = scalar_lea.sflag [#allocation9], %s325
        %s327 = sand.u32 %s110, 1
        %s328 = smul.addr %s327, 4
        %s329 = scalar_lea.vmem [#allocation10], %s328
        %p330 = pneg %p123
        %p331 = pneg %p120
        %s332 = sand.u32 %s136, 1
        %s333 = scalar_lea.sflag [#allocation12], %s332
        %s334 = sand.u32 %s136, 1
        %s335 = smul.addr %s334, 4
        %s336 = scalar_lea.vmem [#allocation11], %s335
        %p337 = pneg %p149
        %p338 = pneg %p146
        %p339 = pneg %p175
        %p340 = pneg %p172
        %s341 = sand.u32 %s162, 1
        %s342 = scalar_lea.sflag [#allocation7], %s341
        %s343 = sand.u32 %s162, 1
        %s344 = scalar_lea.vmem [#allocation13], %s343
        %p345 = scmp.eq.s32.totalorder %s41, 0
        // Predicated region
        $region53: #{tpu_custom_call.1} parent=35 // pred_check
          %p346 = pneg %p345
        $region54: #{tpu_custom_call.1} parent=35 // pred_check_branch
          %348 = sbr.rel (%p346) target = $region56
        $region55: #{tpu_custom_call.1} parent=35 // pred_region
          %349 = vst [vmem:[#allocation2] sm:$0xf] 0.0
        $region56: #{tpu_custom_call.1} parent=35 // pred_fallthru
          _
        %s350 = sshra.s32 %s41, 7
        %s351 = sand.u32 %s41, 127
        %s352 = sadd.s32 %s350, %s40
        %s353 = smul.u32 %s352, 128
        %s354 = sshra.s32 %s41, 7
        %s355 = sand.u32 %s41, 127
        %s356 = sadd.s32 %s353, %s355
        %s357 = sld [smem:[#allocation4 + %s356]]
        %p358 = scmp.gt.s32.totalorder %s357, 0
        // Predicated region
        $region57: #{tpu_custom_call.1} parent=35 // pred_check
          %p359 = pneg %p358
        $region58: #{tpu_custom_call.1} parent=35 // pred_check_branch
          %361 = sbr.rel (%p359) target = $region60
        $region59: #{tpu_custom_call.1} parent=35 // pred_region
          %v362 = vld [vmem:[%s297] sm:$0xf]
          %v363 = vld [vmem:[%s278] sm:$0x1]
          %s364 = smul.u32 %s41, 128
          %v365 = vstv %s364
          %v366 = vsub.s32 %v363, %v365
          %v367 = vlaneseq
          %v368 = vshrl.u32 %v367, 7
          %v369 = vadd.s32 %v368, 8
          %v370 = vadd.s32 %v368, 16
          %v371 = vadd.s32 %v368, 24
          %v372 = vadd.s32 %v368, 32
          %v373 = vadd.s32 %v368, 40
          %v374 = vadd.s32 %v368, 48
          %v375 = vadd.s32 %v368, 56
          %v376 = vadd.s32 %v368, 64
          %v377 = vadd.s32 %v368, 72
          %v378 = vadd.s32 %v368, 80
          %v379 = vadd.s32 %v368, 88
          %v380 = vadd.s32 %v368, 96
          %v381 = vadd.s32 %v368, 104
          %v382 = vadd.s32 %v368, 112
          %v383 = vadd.s32 %v368, 120
          %v384 = vperm.slane %v366, 0
          %vm385 = vcmp.eq.s32.totalorder %v368, %v384
          %vm386 = vcmp.eq.s32.totalorder %v369, %v384
          %vm387 = vcmp.eq.s32.totalorder %v370, %v384
          %vm388 = vcmp.eq.s32.totalorder %v371, %v384
          %vm389 = vcmp.eq.s32.totalorder %v372, %v384
          %vm390 = vcmp.eq.s32.totalorder %v373, %v384
          %vm391 = vcmp.eq.s32.totalorder %v374, %v384
          %vm392 = vcmp.eq.s32.totalorder %v375, %v384
          %vm393 = vcmp.eq.s32.totalorder %v376, %v384
          %vm394 = vcmp.eq.s32.totalorder %v377, %v384
          %vm395 = vcmp.eq.s32.totalorder %v378, %v384
          %vm396 = vcmp.eq.s32.totalorder %v379, %v384
          %vm397 = vcmp.eq.s32.totalorder %v380, %v384
          %vm398 = vcmp.eq.s32.totalorder %v381, %v384
          %vm399 = vcmp.eq.s32.totalorder %v382, %v384
          %vm400 = vcmp.eq.s32.totalorder %v383, %v384
          %v401 = vsel %vm385, 1, 0
          %v402 = vsel %vm386, 1, 0
          %v403 = vsel %vm387, 1, 0
          %v404 = vsel %vm388, 1, 0
          %v405 = vsel %vm389, 1, 0
          %v406 = vsel %vm390, 1, 0
          %v407 = vsel %vm391, 1, 0
          %v408 = vsel %vm392, 1, 0
          %v409 = vsel %vm393, 1, 0
          %v410 = vsel %vm394, 1, 0
          %v411 = vsel %vm395, 1, 0
          %v412 = vsel %vm396, 1, 0
          %v413 = vsel %vm397, 1, 0
          %v414 = vsel %vm398, 1, 0
          %v415 = vsel %vm399, 1, 0
          %v416 = vsel %vm400, 1, 0
          %v417 = vcvt.s32.f32 %v401
          %v418 = vcvt.s32.f32 %v402
          %v419 = vcvt.s32.f32 %v403
          %v420 = vcvt.s32.f32 %v404
          %v421 = vcvt.s32.f32 %v405
          %v422 = vcvt.s32.f32 %v406
          %v423 = vcvt.s32.f32 %v407
          %v424 = vcvt.s32.f32 %v408
          %v425 = vcvt.s32.f32 %v409
          %v426 = vcvt.s32.f32 %v410
          %v427 = vcvt.s32.f32 %v411
          %v428 = vcvt.s32.f32 %v412
          %v429 = vcvt.s32.f32 %v413
          %v430 = vcvt.s32.f32 %v414
          %v431 = vcvt.s32.f32 %v415
          %v432 = vcvt.s32.f32 %v416
          %v433 = vpack.c.bf16 %v418, %v417
          %v434 = vpack.c.bf16 %v420, %v419
          %v435 = vpack.c.bf16 %v422, %v421
          %v436 = vpack.c.bf16 %v424, %v423
          %v437 = vpack.c.bf16 %v426, %v425
          %v438 = vpack.c.bf16 %v428, %v427
          %v439 = vpack.c.bf16 %v430, %v429
          %v440 = vpack.c.bf16 %v432, %v431
          %v441 = vpack.c.bf16 %v362, %v362
          %v442 = vunpack.c.l.bf16 %v441
          %v443 = vsub.f32 %v362, %v442
          %v444 = vpack.c.bf16 %v443, %v443
          %v445 = vunpack.c.l.bf16 %v444
          %v446 = vsub.f32 %v443, %v445
          %v447 = vpack.c.bf16 %v446, %v446
          %448 = vmatpush.bf16.msra.mxu0 %v440
          %449 = vmatpush.bf16.msra.mxu0 %v439
          %450 = vmatpush.bf16.msra.mxu0 %v438
          %451 = vmatpush.bf16.msra.mxu0 %v437
          %452 = vmatpush.bf16.msra.mxu0 %v436
          %453 = vmatpush.bf16.msra.mxu0 %v435
          %454 = vmatpush.bf16.msra.mxu0 %v434
          %455 = vmatpush.bf16.msra.mxu0 %v433
          %456 = vmatmul.bf16.gmra.mxu0 %v444
          %v457 = vpop.f32.mrf.mxu0
          %v458 = vadd.f32 0.0, %v457
          %v459 = vpop.f32.mrf.mxu0
          %460 = vdwg.mxu0
          %461 = vmatpush.bf16.msra.mxu0 %v440
          %462 = vmatpush.bf16.msra.mxu0 %v439
          %463 = vmatpush.bf16.msra.mxu0 %v438
          %464 = vmatpush.bf16.msra.mxu0 %v437
          %465 = vmatpush.bf16.msra.mxu0 %v436
          %466 = vmatpush.bf16.msra.mxu0 %v435
          %467 = vmatpush.bf16.msra.mxu0 %v434
          %468 = vmatpush.bf16.msra.mxu0 %v433
          %469 = vmatmul.bf16.gmra.mxu0 %v441
          %v470 = vpop.f32.mrf.mxu0
          %v471 = vadd.f32 %v458, %v470
          %v472 = vpop.f32.mrf.mxu0
          %473 = vdwg.mxu0
          %474 = vmatpush.bf16.msra.mxu0 %v440
          %475 = vmatpush.bf16.msra.mxu0 %v439
          %476 = vmatpush.bf16.msra.mxu0 %v438
          %477 = vmatpush.bf16.msra.mxu0 %v437
          %478 = vmatpush.bf16.msra.mxu0 %v436
          %479 = vmatpush.bf16.msra.mxu0 %v435
          %480 = vmatpush.bf16.msra.mxu0 %v434
          %481 = vmatpush.bf16.msra.mxu0 %v433
          %482 = vmatmul.bf16.gmra.mxu0 %v447
          %v483 = vpop.f32.mrf.mxu0
          %v484 = vadd.f32 0.0, %v483
          %v485 = vpop.f32.mrf.mxu0
          %486 = vdwg.mxu0
          %v487 = vadd.f32 %v471, %v484
          %v488 = vld [vmem:[#allocation2] sm:$0xf]
          %v489 = vadd.f32 %v488, %v487
          %490 = vst [vmem:[#allocation2] sm:$0xf] %v489
        $region60: #{tpu_custom_call.1} parent=35 // pred_fallthru
          _
        %p491 = scmp.eq.s32.totalorder %s41, 1
        // Predicated region
        $region61: #{tpu_custom_call.1} parent=35 // pred_check
          %p492 = pneg %p491
        $region62: #{tpu_custom_call.1} parent=35 // pred_check_branch
          %494 = sbr.rel (%p492) target = $region64
        $region63: #{tpu_custom_call.1} parent=35 // pred_region
          %v495 = vld [vmem:[%s287] sm:$0x1]
          %v496 = vld [vmem:[#allocation2] sm:$0xf]
          %v497 = vld [vmem:[%s307] sm:$0xf]
          %v498 = vsub.f32 %v496, %v497
          %v500 = vperm.slane %v495, 0
          %v502 = vmul.f32 %v498, %v500
          %v503 = vand.u32 2147483647, %v502
          %vm504 = vcmp.lt.f32.partialorder %v503, 1.0
          %v505 = vmul.f32 %v502, 0.5
          %v506 = vmul.f32 %v505, %v502
          %v507 = vsub.f32 %v503, 0.5
          %v508 = vsel %vm504, %v506, %v507
          %vm509 = vcmask 1043456
          %v510 = vsel %vm509, %v508, 0.0
          %v511 = vrot.slane %v510, 4
          %v512 = vadd.f32 %v510, %v511
          %v513 = vrot.slane %v512, 2
          %v514 = vadd.f32 %v512, %v513
          %v515 = vrot.slane %v514, 1
          %v516 = vadd.f32 %v514, %v515
          %517 = vst [vmem:[%s344] sm:$0x1] %v516
        $region64: #{tpu_custom_call.1} parent=35 // pred_fallthru
          _
        %s518 = sand.u32 %s162, 1
        %s519 = scalar_lea.sflag [#allocation7], %s518
        %s520 = sand.u32 %s162, 1
        %s521 = scalar_lea.vmem [#allocation13], %s520
        // Predicated region
        $region65: #{tpu_custom_call.1} parent=35 // pred_check
          %p522 = pneg %p172
        $region66: #{tpu_custom_call.1} parent=35 // pred_check_branch
          %524 = sbr.rel (%p522) target = $region68
        $region67: #{tpu_custom_call.1} parent=35 // pred_region
          %526 = vsyncadd %s519, 0
          %s527 = scalar_lea.hbm %s5, %s40
          %s529 = sshll.u32 %s521, 4
          %s530 = int_to_ptr.vmem [resolvable:$true] %s529
          %s531 = sshll.u32 %s527, 4
          %s532 = int_to_ptr.hbm [resolvable:$true] %s531
          %534 = dma.vmem_to_hbm [thread:$0]  %s530, 16, %s532, %s519
        $region68: #{tpu_custom_call.1} parent=35 // pred_fallthru
          _
      $region36: #{tpu_custom_call.1} parent=5 // pred_fallthru
        _
      %p535 = scmp.le.s32.totalorder 2, %s31
      // Predicated region
      $region69: #{tpu_custom_call.1} parent=5 // pred_check
        %p536 = pneg %p535
      $region70: #{tpu_custom_call.1} parent=5 // pred_check_branch
        %538 = sbr.rel (%p536) target = $region72
      $region71: #{tpu_custom_call.1} parent=5 // pred_region
        %s539 = ssub.s32 %s31, 2
        // Predicated region
        $region73: #{tpu_custom_call.1} parent=71 // pred_check
          %p540 = pneg %p178
        $region74: #{tpu_custom_call.1} parent=71 // pred_check_branch
          %542 = sbr.rel (%p540) target = $region76
        $region75: #{tpu_custom_call.1} parent=71 // pred_region
          %s543 = sand.u32 %s163, 1
          %s544 = scalar_lea.sflag [#allocation7], %s543
          %s545 = sand.u32 %s163, 1
          %s546 = scalar_lea.vmem [#allocation13], %s545
          %548 = dma.done %s544, 16
        $region76: #{tpu_custom_call.1} parent=71 // pred_fallthru
          _
      $region72: #{tpu_custom_call.1} parent=5 // pred_fallthru
        _
    $region6: #{tpu_custom_call.1} parent=1 // loop_footer
      %s35 = sadd.s32 1, %s31
    $region7: #{tpu_custom_call.1} parent=1 // loop_footer_branch
      %30 = sbr.rel target = $region3
    $region8: #{tpu_custom_call.1} parent=1 // loop_exit
      _
    %549 = vsyncpa [#allocation6], 1
    %s550 = scalar_lea.sflag [#allocation6], 1
    %551 = vsyncpa %s550, 1
    %552 = vsyncpa [#allocation9], 1
    %s553 = scalar_lea.sflag [#allocation9], 1
    %554 = vsyncpa %s553, 1
    %555 = vsyncpa [#allocation12], 1
    %s556 = scalar_lea.sflag [#allocation12], 1
    %557 = vsyncpa %s556, 1
    %558 = vsyncpa [#allocation7], 1
    %s559 = scalar_lea.sflag [#allocation7], 1
    %560 = vsyncpa %s559, 1

</llo_original>
